<compile_context>
chip_gen: v7x
topology: tpu7x:2x2x1
jax: 0.10.0
libtpu: 0.0.40
codegen_flags: <defaults>
</compile_context>

<pallas_src>
import functools

import jax
import jax.numpy as jnp
from jax.experimental import pallas as pl
from jax.experimental.pallas import tpu as pltpu

CIN = 3    # input channels of conv0 / conv11
COUT = 24  # output channels of conv11


def _encoder_kernel(xf_ref, wf_ref, bf_ref, o_ref, *, wp):
    # xf_ref: (NB, CIN, PF)     reflect-padded input, padded spatial flattened
    #                           (PF = Hp*Wp + 2 so the largest tap shift stays in range)
    # wf_ref: (COUT, 9*CIN)     conv0-folded 3x3 weights, rows ordered (kh, kw, cin)
    # bf_ref: (COUT, 1)         fused bias (broadcast over lanes)
    # o_ref : (NB, COUT, H*Wp)  lane-dense output slab (2 garbage cols/row dropped outside)
    nb = xf_ref.shape[0]
    L = o_ref.shape[2]                      # H * Wp
    wf = wf_ref[...]                        # (COUT, 27)
    bf = bf_ref[...]                        # (COUT, 1)
    for b in range(nb):                     # small static unroll over images in the block
        xb = xf_ref[b]                      # (CIN, PF)
        # im2col: tap (kh, kw) is a static lane-offset slice of the flattened
        # padded image; stacking the 9 taps gives (27, L) with no reshapes.
        taps = [xb[:, kh * wp + kw: kh * wp + kw + L]
                for kh in range(3) for kw in range(3)]
        patch = jnp.concatenate(taps, axis=0)                         # (9*CIN, L)
        # Single fused K=27 matmul on the MXU, f32 accumulation, + bias, ReLU.
        acc = jnp.dot(wf, patch, preferred_element_type=jnp.float32) + bf
        o_ref[b] = jnp.maximum(acc, 0.0).astype(o_ref.dtype)


def small_encoder_forward(x_nchw, w0_oihw, b0, w1_oihw, b1, *, images_per_block=1):
    """x_nchw: (N, 3, H, W) float32. Returns (N, 24, H, W) float32 (NCHW)."""
    N, C, H, W = x_nchw.shape
    assert C == CIN
    assert H >= 2 and W >= 2, "ReflectionPad2d(1) needs H, W >= 2"
    nb = images_per_block
    assert N % nb == 0

    Hp, Wp = H + 2, W + 2
    L = H * Wp                 # per-image output slab length (W valid + 2 garbage cols per row)
    PF = Hp * Wp + 2           # flattened padded input + 2 tail slots for the largest tap shift

    # --- trace-time weight fold: conv0 (1x1) into conv11 (3x3) -------------------
    w0_mat = w0_oihw[:, :, 0, 0].astype(jnp.float32)                  # W0[c_mid, c_in]
    # Wf[o, kh, kw, i] = sum_c W1[o, c, kh, kw] * W0[c, i]   (exact f32, no dot)
    wf = jnp.sum(w1_oihw[:, :, :, :, None].astype(jnp.float32)
                 * w0_mat[None, :, None, None, :], axis=1)            # (COUT, 3, 3, CIN)
    wf = wf.reshape(COUT, 9 * CIN)                                    # rows = (kh, kw, cin)
    bf = (b1.astype(jnp.float32)
          + jnp.sum(w1_oihw.astype(jnp.float32) * b0[None, :, None, None],
                    axis=(1, 2, 3))).reshape(COUT, 1)

    # --- input prep: reflect pad + flatten padded spatial (small, 3-channel tensor) ---
    xp = jnp.pad(x_nchw, ((0, 0), (0, 0), (1, 1), (1, 1)), mode="reflect")
    xf = jnp.pad(xp.reshape(N, CIN, Hp * Wp),
                 ((0, 0), (0, 0), (0, PF - Hp * Wp)))                 # (N, CIN, PF)

    kernel = functools.partial(_encoder_kernel, wp=Wp)
    out_slab = pl.pallas_call(
        kernel,
        out_shape=jax.ShapeDtypeStruct((N, COUT, L), jnp.float32),
        grid_spec=pltpu.PrefetchScalarGridSpec(
            num_scalar_prefetch=0,
            grid=(N // nb,),
            in_specs=[
                pl.BlockSpec((nb, CIN, PF), lambda b: (b, 0, 0)),
                pl.BlockSpec((COUT, 9 * CIN), lambda b: (0, 0)),
                pl.BlockSpec((COUT, 1), lambda b: (0, 0)),
            ],
            out_specs=pl.BlockSpec((nb, COUT, L), lambda b: (b, 0, 0)),
        ),
        compiler_params=pltpu.CompilerParams(
            dimension_semantics=("parallel",)),
    )(xf, wf, bf)

    # (N, COUT, H*Wp) -> (N, COUT, H, Wp) -> drop the 2 halo columns per row.
    return out_slab.reshape(N, COUT, H, Wp)[:, :, :, :W]


def reference_forward(x_nchw, w0_oihw, b0, w1_oihw, b1):
    """Pure-JAX reference mirroring the PyTorch NCHW semantics."""
    dn = ("NCHW", "OIHW", "NCHW")
    y = jax.lax.conv_general_dilated(x_nchw, w0_oihw, (1, 1), "VALID",
                                     dimension_numbers=dn)
    y = y + b0[None, :, None, None]
    y = jnp.pad(y, ((0, 0), (0, 0), (1, 1), (1, 1)), mode="reflect")
    y = jax.lax.conv_general_dilated(y, w1_oihw, (1, 1), "VALID",
                                     dimension_numbers=dn)
    y = y + b1[None, :, None, None]
    return jnp.maximum(y, 0.0)


if __name__ == "__main__":
    key = jax.random.PRNGKey(0)
    k_x, k_w0, k_b0, k_w1, k_b1 = jax.random.split(key, 5)

    N, H, W = 2, 16, 16
    x = jax.random.normal(k_x, (N, CIN, H, W), dtype=jnp.float32)

    # PyTorch conv weight shapes (OIHW): conv0 (3,3,1,1)+(3,), conv11 (24,3,3,3)+(24,)
    w0 = jax.random.normal(k_w0, (CIN, CIN, 1, 1), dtype=jnp.float32) * 0.3
    b0 = jax.random.normal(k_b0, (CIN,), dtype=jnp.float32) * 0.1
    w1 = jax.random.normal(k_w1, (COUT, CIN, 3, 3), dtype=jnp.float32) * 0.2
    b1 = jax.random.normal(k_b1, (COUT,), dtype=jnp.float32) * 0.1

    ref = jax.block_until_ready(reference_forward(x, w0, b0, w1, b1))

    # Default: one image per grid step -> grid=(N,), "parallel" (uses both v7x TCs).
    out = jax.block_until_ready(small_encoder_forward(x, w0, b0, w1, b1))
    assert out.shape == (N, COUT, H, W), out.shape
    assert jnp.allclose(out, ref, atol=1e-3, rtol=1e-3), \
        float(jnp.max(jnp.abs(out - ref)))

    # Also exercise the multi-image-per-grid-step path (whole batch in one step).
    out2 = jax.block_until_ready(
        small_encoder_forward(x, w0, b0, w1, b1, images_per_block=2))
    assert jnp.allclose(out2, ref, atol=1e-3, rtol=1e-3), \
        float(jnp.max(jnp.abs(out2 - ref)))

    print("KERNEL_OK")
</pallas_src>

<mosaic_0001>
module attributes {stable_mosaic.version = 11 : i64} {
  func.func @_encoder_kernel(%arg0: i32, %arg1: memref<1x3x326xf32, #tpu.memory_space<vmem>>, %arg2: memref<24x27xf32, #tpu.memory_space<vmem>>, %arg3: memref<24x1xf32, #tpu.memory_space<vmem>>, %arg4: memref<1x24x288xf32, #tpu.memory_space<vmem>>) attributes {dimension_semantics = [#tpu.dimension_semantics<parallel>], iteration_bounds = array<i64: 2>, scalar_prefetch = 0 : i64, scratch_operands = 0 : i64, tpu.core_type = #tpu.core_type<tc>, window_params = [{transform_indices = @transform_0, window_bounds = array<i64: 1, 3, 326>}, {pipeline_mode = #tpu.pipeline_mode<synchronous>, transform_indices = @transform_1, window_bounds = array<i64: 24, 27>}, {pipeline_mode = #tpu.pipeline_mode<synchronous>, transform_indices = @transform_2, window_bounds = array<i64: 24, 1>}, {transform_indices = @transform_3, window_bounds = array<i64: 1, 24, 288>}]} {
    %c0 = arith.constant 0 : index
    %c0_0 = arith.constant 0 : index
    %0 = vector.load %arg2[%c0, %c0_0] : memref<24x27xf32, #tpu.memory_space<vmem>>, vector<24x27xf32>
    %c0_1 = arith.constant 0 : index
    %c0_2 = arith.constant 0 : index
    %1 = vector.load %arg3[%c0_1, %c0_2] : memref<24x1xf32, #tpu.memory_space<vmem>>, vector<24x1xf32>
    %c0_3 = arith.constant 0 : index
    %c0_4 = arith.constant 0 : index
    %c0_5 = arith.constant 0 : index
    %2 = vector.load %arg1[%c0_3, %c0_4, %c0_5] : memref<1x3x326xf32, #tpu.memory_space<vmem>>, vector<1x3x326xf32>
    %3 = vector.shape_cast %2 : vector<1x3x326xf32> to vector<3x326xf32>
    %4 = vector.extract_strided_slice %3 {offsets = [0, 0], sizes = [3, 288], strides = [1, 1]} : vector<3x326xf32> to vector<3x288xf32>
    %5 = vector.extract_strided_slice %3 {offsets = [0, 1], sizes = [3, 288], strides = [1, 1]} : vector<3x326xf32> to vector<3x288xf32>
    %6 = vector.extract_strided_slice %3 {offsets = [0, 2], sizes = [3, 288], strides = [1, 1]} : vector<3x326xf32> to vector<3x288xf32>
    %7 = vector.extract_strided_slice %3 {offsets = [0, 18], sizes = [3, 288], strides = [1, 1]} : vector<3x326xf32> to vector<3x288xf32>
    %8 = vector.extract_strided_slice %3 {offsets = [0, 19], sizes = [3, 288], strides = [1, 1]} : vector<3x326xf32> to vector<3x288xf32>
    %9 = vector.extract_strided_slice %3 {offsets = [0, 20], sizes = [3, 288], strides = [1, 1]} : vector<3x326xf32> to vector<3x288xf32>
    %10 = vector.extract_strided_slice %3 {offsets = [0, 36], sizes = [3, 288], strides = [1, 1]} : vector<3x326xf32> to vector<3x288xf32>
    %11 = vector.extract_strided_slice %3 {offsets = [0, 37], sizes = [3, 288], strides = [1, 1]} : vector<3x326xf32> to vector<3x288xf32>
    %12 = vector.extract_strided_slice %3 {offsets = [0, 38], sizes = [3, 288], strides = [1, 1]} : vector<3x326xf32> to vector<3x288xf32>
    %13 = tpu.concatenate %4, %5, %6, %7, %8, %9, %10, %11, %12 in 0 : vector<3x288xf32>, vector<3x288xf32>, vector<3x288xf32>, vector<3x288xf32>, vector<3x288xf32>, vector<3x288xf32>, vector<3x288xf32>, vector<3x288xf32>, vector<3x288xf32> -> vector<27x288xf32>
    %cst = arith.constant dense<0.000000e+00> : vector<24x288xf32>
    %14 = tpu.matmul %0, %13, %cst {dimension_numbers = #tpu.dot_dimension_numbers<[1], [0], [0], [1], [0, 0, 1, 1], [], []>} : vector<24x27xf32>, vector<27x288xf32>, vector<24x288xf32> -> vector<24x288xf32>
    %15 = vector.broadcast %1 : vector<24x1xf32> to vector<24x288xf32>
    %16 = arith.addf %14, %15 : vector<24x288xf32>
    %cst_6 = arith.constant 0.000000e+00 : f32
    %17 = vector.broadcast %cst_6 : f32 to vector<24x288xf32>
    %18 = arith.maximumf %16, %17 : vector<24x288xf32>
    %c0_7 = arith.constant 0 : index
    %c0_8 = arith.constant 0 : index
    %c0_9 = arith.constant 0 : index
    %19 = vector.load %arg4[%c0_7, %c0_8, %c0_9] : memref<1x24x288xf32, #tpu.memory_space<vmem>>, vector<1x24x288xf32>
    %20 = vector.shape_cast %19 : vector<1x24x288xf32> to vector<24x288xf32>
    %21 = vector.shape_cast %18 : vector<24x288xf32> to vector<1x24x288xf32>
    tpu.vector_store %arg4[%c0_7, %c0_8, %c0_9], %21 {strides = array<i32>} : memref<1x24x288xf32, #tpu.memory_space<vmem>>, vector<1x24x288xf32>,
    return
  }
  func.func @transform_0(%arg0: i32) -> (i32, i32, i32) {
    %c0_i32 = arith.constant 0 : i32
    %c0_i32_0 = arith.constant 0 : i32
    %c0_i32_1 = arith.constant 0 : i32
    return %arg0, %c0_i32, %c0_i32_0 : i32, i32, i32
  }
  func.func @transform_1(%arg0: i32) -> (i32, i32) {
    %c0_i32 = arith.constant 0 : i32
    %c0_i32_0 = arith.constant 0 : i32
    %c0_i32_1 = arith.constant 0 : i32
    return %c0_i32, %c0_i32_0 : i32, i32
  }
  func.func @transform_2(%arg0: i32) -> (i32, i32) {
    %c0_i32 = arith.constant 0 : i32
    %c0_i32_0 = arith.constant 0 : i32
    %c0_i32_1 = arith.constant 0 : i32
    return %c0_i32, %c0_i32_0 : i32, i32
  }
  func.func @transform_3(%arg0: i32) -> (i32, i32, i32) {
    %c0_i32 = arith.constant 0 : i32
    %c0_i32_0 = arith.constant 0 : i32
    %c0_i32_1 = arith.constant 0 : i32
    return %arg0, %c0_i32, %c0_i32_0 : i32, i32, i32
  }
}

</mosaic_0001>

<llo_original>
// kernel: tpu_custom_call.1
$region0: #{tpu_custom_call.1}
  #allocation0 [shape = 'u32[]', space=smem, size = 0x4, offset = 0x4, fixed_abs, tag = 'smem constant byte address 0x4 - core index']
  #allocation1 [shape = 'u32[144,128]{1,0:T(1,128)}', space=vmem, size = 0x12000, scoped, tag = 'internal scratch']
  %s0 = inlined_call_operand.vmem [shape: f32[2,3,326], index: 0, kind: input, shape index: {}]
  %s1 = inlined_call_operand.vmem [shape: f32[24,27], index: 1, kind: input, shape index: {}]
  %s2 = inlined_call_operand.vmem [shape: f32[24,1], index: 2, kind: input, shape index: {}]
  %s3 = inlined_call_operand.hbm [shape: f32[2,24,288], index: 3, kind: output, shape index: {}]
  %s4 = sld [smem:[#allocation0]]
  $region45: #{tpu_custom_call.1} parent=0
    _
  %s6 = ssub.s32 1, %s4
  %s7 = scalar_select 0, %s6, %s4
  $region1: #{tpu_custom_call.1} parent=0
    #allocation2 [shape = 'u8[73728]{0}', space=vmem, size = 0x12000, scoped, tag = 'output window, operand 0']
    #allocation3 [shape = 's32[2]{0}', space=sflag, size = 0x8, scoped, tag = 'scoped memory for tpu_custom_call.1']
    %8 = vsyncpa [#allocation3], 0
    %s9 = scalar_lea.sflag [#allocation3], 1
    %10 = vsyncpa %s9, 0
    loop: start=0, step=1, limit=4
    $region2: #{tpu_custom_call.1} parent=1 // loop_pre_header
      _
    $region3: #{tpu_custom_call.1} parent=1 // loop_header
      %s12 = sphi 0, %s16
      %p13 = scmp.ge.s32.totalorder %s12, 4
      %s22 = sphi 0, %s24
      %s25 = sphi 0, %s22
      %s26 = sphi 0, %s25
      %s42 = sphi 0, %s26
      %s46 = sphi 0, %s46
      %s48 = sphi 0, %s46
      %s49 = sphi 0, %s48
      %s63 = sphi 0, %s49
      %s67 = sphi 0, %s67
      %s69 = sphi 0, %s67
      %s70 = sphi 0, %s69
      %s84 = sphi 0, %s70
      %s90 = sphi 0, %s92
      %s93 = sphi 0, %s90
      %s94 = sphi 0, %s93
      %s110 = sphi 0, %s94
    $region4: #{tpu_custom_call.1} parent=1 // loop_header_branch
      %15 = sbr.rel (%p13) target = $region8
    $region5: #{tpu_custom_call.1} parent=1 // loop_body
      %s17 = ssub.s32 %s12, 1
      %s18 = ssub.s32 %s12, 2
      %s19 = sadd.s32 %s12, 1
      %s20 = ssub.s32 %s12, %s19
      %p21 = scmp.eq.s32.totalorder %s20, 0
      %s23 = sadd.s32 %s22, 1
      %s24 = scalar_select %p21, %s22, %s23
      %p27 = pneg %p21
      %p28 = scmp.eq.s32.totalorder %s12, 1
      %p29 = por %p27, %p28
      %p30 = scmp.ne.s32.totalorder %s22, %s25
      %p31 = scmp.eq.s32.totalorder %s12, 0
      %p32 = por %p30, %p31
      %p33 = scmp.ne.s32.totalorder %s22, %s25
      %p34 = scmp.eq.s32.totalorder %s17, 1
      %p35 = por %p33, %p34
      %p36 = scmp.ne.s32.totalorder %s25, %s26
      %p37 = scmp.eq.s32.totalorder %s17, 0
      %p38 = por %p36, %p37
      %p39 = scmp.ne.s32.totalorder %s25, %s26
      %p40 = scmp.eq.s32.totalorder %s18, 1
      %p41 = por %p39, %p40
      %p43 = scmp.ne.s32.totalorder %s26, %s42
      %p44 = scmp.eq.s32.totalorder %s18, 0
      %p45 = por %p43, %p44
      %s47 = sadd.s32 %s46, 1
      %p50 = scmp.eq.s32.totalorder %s12, 1
      %p51 = scmp.ne.s32.totalorder %s46, %s48
      %p52 = scmp.eq.s32.totalorder %s12, 0
      %p53 = por %p51, %p52
      %p54 = scmp.ne.s32.totalorder %s46, %s48
      %p55 = scmp.eq.s32.totalorder %s17, 1
      %p56 = por %p54, %p55
      %p57 = scmp.ne.s32.totalorder %s48, %s49
      %p58 = scmp.eq.s32.totalorder %s17, 0
      %p59 = por %p57, %p58
      %p60 = scmp.ne.s32.totalorder %s48, %s49
      %p61 = scmp.eq.s32.totalorder %s18, 1
      %p62 = por %p60, %p61
      %p64 = scmp.ne.s32.totalorder %s49, %s63
      %p65 = scmp.eq.s32.totalorder %s18, 0
      %p66 = por %p64, %p65
      %s68 = sadd.s32 %s67, 1
      %p71 = scmp.eq.s32.totalorder %s12, 1
      %p72 = scmp.ne.s32.totalorder %s67, %s69
      %p73 = scmp.eq.s32.totalorder %s12, 0
      %p74 = por %p72, %p73
      %p75 = scmp.ne.s32.totalorder %s67, %s69
      %p76 = scmp.eq.s32.totalorder %s17, 1
      %p77 = por %p75, %p76
      %p78 = scmp.ne.s32.totalorder %s69, %s70
      %p79 = scmp.eq.s32.totalorder %s17, 0
      %p80 = por %p78, %p79
      %p81 = scmp.ne.s32.totalorder %s69, %s70
      %p82 = scmp.eq.s32.totalorder %s18, 1
      %p83 = por %p81, %p82
      %p85 = scmp.ne.s32.totalorder %s70, %s84
      %p86 = scmp.eq.s32.totalorder %s18, 0
      %p87 = por %p85, %p86
      %s88 = ssub.s32 %s12, %s19
      %p89 = scmp.eq.s32.totalorder %s88, 0
      %s91 = sadd.s32 %s90, 1
      %s92 = scalar_select %p89, %s90, %s91
      %p95 = pneg %p89
      %p96 = scmp.eq.s32.totalorder %s12, 1
      %p97 = por %p95, %p96
      %p98 = scmp.ne.s32.totalorder %s90, %s93
      %p99 = scmp.eq.s32.totalorder %s12, 0
      %p100 = por %p98, %p99
      %p101 = scmp.ne.s32.totalorder %s90, %s93
      %p102 = scmp.eq.s32.totalorder %s17, 1
      %p103 = por %p101, %p102
      %p104 = scmp.ne.s32.totalorder %s93, %s94
      %p105 = scmp.eq.s32.totalorder %s17, 0
      %p106 = por %p104, %p105
      %p107 = scmp.ne.s32.totalorder %s93, %s94
      %p108 = scmp.eq.s32.totalorder %s18, 1
      %p109 = por %p107, %p108
      %p111 = scmp.ne.s32.totalorder %s94, %s110
      %p112 = scmp.eq.s32.totalorder %s18, 0
      %p113 = por %p111, %p112
      %p114 = scmp.le.s32.totalorder 1, %s12
      %p115 = scmp.lt.s32.totalorder %s12, 3
      %p116 = pnand %p114, %p115
      %p117 = pneg %p116
      // Predicated region
      $region9: #{tpu_custom_call.1} parent=5 // pred_check
        _
      $region10: #{tpu_custom_call.1} parent=5 // pred_check_branch
        %119 = sbr.rel (%p116) target = $region12
      $region11: #{tpu_custom_call.1} parent=5 // pred_region
        %s120 = ssub.s32 %s12, 1
        // Predicated region
        $region13: #{tpu_custom_call.1} parent=11 // pred_check
          %p121 = pneg %p59
        $region14: #{tpu_custom_call.1} parent=11 // pred_check_branch
          %123 = sbr.rel (%p121) target = $region16
        $region15: #{tpu_custom_call.1} parent=11 // pred_region
          _
        $region16: #{tpu_custom_call.1} parent=11 // pred_fallthru
          _
        // Predicated region
        $region17: #{tpu_custom_call.1} parent=11 // pred_check
          %p124 = pneg %p80
        $region18: #{tpu_custom_call.1} parent=11 // pred_check_branch
          %126 = sbr.rel (%p124) target = $region20
        $region19: #{tpu_custom_call.1} parent=11 // pred_region
          _
        $region20: #{tpu_custom_call.1} parent=11 // pred_fallthru
          _
      $region12: #{tpu_custom_call.1} parent=5 // pred_fallthru
        _
      %p127 = scmp.lt.s32.totalorder %s12, 2
      // Predicated region
      $region21: #{tpu_custom_call.1} parent=5 // pred_check
        %p128 = pneg %p127
      $region22: #{tpu_custom_call.1} parent=5 // pred_check_branch
        %130 = sbr.rel (%p128) target = $region24
      $region23: #{tpu_custom_call.1} parent=5 // pred_region
        // Predicated region
        $region25: #{tpu_custom_call.1} parent=23 // pred_check
          %p131 = pneg %p32
        $region26: #{tpu_custom_call.1} parent=23 // pred_check_branch
          %133 = sbr.rel (%p131) target = $region28
        $region27: #{tpu_custom_call.1} parent=23 // pred_region
          %p134 = scmp.lt.s32.totalorder %s12, 1
          %s135 = scalar_select %p134, %s12, 1
          %s136 = smul.addr %s135, 3
          %s137 = smul.addr %s136, 4
          %s138 = scalar_lea.vmem %s0, %s137
        $region28: #{tpu_custom_call.1} parent=23 // pred_fallthru
          _
      $region24: #{tpu_custom_call.1} parent=5 // pred_fallthru
        _
      %p139 = scmp.le.s32.totalorder 1, %s12
      %p140 = scmp.lt.s32.totalorder %s12, 3
      %p141 = pnand %p139, %p140
      %p142 = pneg %p141
      // Predicated region
      $region29: #{tpu_custom_call.1} parent=5 // pred_check
        _
      $region30: #{tpu_custom_call.1} parent=5 // pred_check_branch
        %144 = sbr.rel (%p141) target = $region32
      $region31: #{tpu_custom_call.1} parent=5 // pred_region
        %s145 = ssub.s32 %s12, 1
        %p146 = scmp.lt.s32.totalorder %s17, 1
        %s147 = scalar_select %p146, %s17, 1
        %s148 = smul.addr %s147, 3
        %s149 = smul.addr %s148, 4
        %s150 = scalar_lea.vmem %s0, %s149
        %p151 = pneg %p38
        %p152 = pneg %p35
        %p153 = pneg %p59
        %p154 = pneg %p56
        %p155 = pneg %p80
        %p156 = pneg %p77
        %p157 = pneg %p106
        %p158 = pneg %p103
        %s159 = sand.u32 %s93, 1
        %s160 = scalar_lea.sflag [#allocation3], %s159
        %s161 = sand.u32 %s93, 1
        %s162 = smul.addr %s161, 72
        %s163 = scalar_lea.vmem [#allocation2], %s162
        %p164 = scmp.lt.s32.totalorder %s17, 1
        %s165 = scalar_select %p164, %s17, 1
        %s166 = smul.addr %s165, 3
        %s167 = smul.addr %s166, 4
        %s168 = scalar_lea.vmem %s0, %s167
        %v169 = vld [vmem:[%s1] sm:$0xff]
        %v170 = vld [vmem:[%s1 + $0x8] sm:$0xff]
        %v171 = vld [vmem:[%s1 + $0x10] sm:$0xff]
        %v172 = vld [vmem:[%s2] sm:$0xff]
        %v173 = vld [vmem:[%s2 + $0x8] sm:$0xff]
        %v174 = vld [vmem:[%s2 + $0x10] sm:$0xff]
        %v175 = vld [vmem:[%s168] sm:$0x77]
        %v176 = vld [vmem:[%s168 + $0x8] sm:$0x7]
        %v179 = vcombine.high %v175, %v175
        %v181 = vrot.slane %v175, 5
        %v182 = vrot.slane %v179, 5
        %v183 = vrot.slane %v176, 5
        %184 = vrot.lane.b32.xlu0 %v181, 127
        %v185 = vpop.permute.xlu0 %184
        %186 = vrot.lane.b32.xlu0 %v182, 127
        %v187 = vpop.permute.xlu0 %186
        %188 = vrot.lane.b32.xlu0 %v183, 127
        %v189 = vpop.permute.xlu0 %188
        %vm190 = vcmask 1039360
        %v191 = vsel %vm190, %v185, %v187
        %v192 = vsel %vm190, %v187, %v189
        %v196 = vrot.slane %v175, 2
        %v197 = vrot.slane %v179, 2
        %v198 = vrot.slane %v176, 2
        %199 = vrot.lane.b32.xlu0 %v196, 126
        %v200 = vpop.permute.xlu0 %199
        %201 = vrot.lane.b32.xlu0 %v197, 126
        %v202 = vpop.permute.xlu0 %201
        %203 = vrot.lane.b32.xlu0 %v198, 126
        %v204 = vpop.permute.xlu0 %203
        %vm205 = vcmask 1031168
        %v206 = vsel %vm205, %v200, %v202
        %v207 = vsel %vm205, %v202, %v204
        %v211 = vrot.slane %v175, 7
        %v212 = vrot.slane %v179, 7
        %v213 = vrot.slane %v176, 7
        %214 = vrot.lane.b32.xlu0 %v211, 110
        %v215 = vpop.permute.xlu0 %214
        %216 = vrot.lane.b32.xlu0 %v212, 110
        %v217 = vpop.permute.xlu0 %216
        %218 = vrot.lane.b32.xlu0 %v213, 110
        %v219 = vpop.permute.xlu0 %218
        %vm220 = vcmask 900096
        %v221 = vsel %vm220, %v215, %v217
        %v222 = vsel %vm220, %v217, %v219
        %v226 = vcombine.low %v175, %v175
        %v227 = vcombine.low %v176, %v176
        %228 = vrot.lane.b32.xlu0 %v226, 109
        %v229 = vpop.permute.xlu0 %228
        %230 = vrot.lane.b32.xlu0 %v175, 109
        %v231 = vpop.permute.xlu0 %230
        %232 = vrot.lane.b32.xlu0 %v227, 109
        %v233 = vpop.permute.xlu0 %232
        %vm234 = vcmask 891904
        %v235 = vsel %vm234, %v229, %v231
        %v236 = vsel %vm234, %v231, %v233
        %v240 = vrot.slane %v175, 1
        %v241 = vrot.slane %v179, 1
        %v242 = vrot.slane %v176, 1
        %243 = vrot.lane.b32.xlu0 %v240, 108
        %v244 = vpop.permute.xlu0 %243
        %245 = vrot.lane.b32.xlu0 %v241, 108
        %v246 = vpop.permute.xlu0 %245
        %247 = vrot.lane.b32.xlu0 %v242, 108
        %v248 = vpop.permute.xlu0 %247
        %vm249 = vcmask 883712
        %v250 = vsel %vm249, %v244, %v246
        %v251 = vsel %vm249, %v246, %v248
        %v255 = vrot.slane %v175, 6
        %v256 = vrot.slane %v179, 6
        %v257 = vrot.slane %v176, 6
        %258 = vrot.lane.b32.xlu0 %v255, 92
        %v259 = vpop.permute.xlu0 %258
        %260 = vrot.lane.b32.xlu0 %v256, 92
        %v261 = vpop.permute.xlu0 %260
        %262 = vrot.lane.b32.xlu0 %v257, 92
        %v263 = vpop.permute.xlu0 %262
        %vm264 = vcmask 752640
        %v265 = vsel %vm264, %v259, %v261
        %v266 = vsel %vm264, %v261, %v263
        %v270 = vrot.slane %v175, 3
        %v271 = vrot.slane %v179, 3
        %v272 = vrot.slane %v176, 3
        %273 = vrot.lane.b32.xlu0 %v270, 91
        %v274 = vpop.permute.xlu0 %273
        %275 = vrot.lane.b32.xlu0 %v271, 91
        %v276 = vpop.permute.xlu0 %275
        %277 = vrot.lane.b32.xlu0 %v272, 91
        %v278 = vpop.permute.xlu0 %277
        %vm279 = vcmask 744448
        %v280 = vsel %vm279, %v274, %v276
        %v281 = vsel %vm279, %v276, %v278
        %285 = vrot.lane.b32.xlu0 %v175, 90
        %v286 = vpop.permute.xlu0 %285
        %287 = vrot.lane.b32.xlu0 %v179, 90
        %v288 = vpop.permute.xlu0 %287
        %289 = vrot.lane.b32.xlu0 %v176, 90
        %v290 = vpop.permute.xlu0 %289
        %vm291 = vcmask 736256
        %v292 = vsel %vm291, %v286, %v288
        %v293 = vsel %vm291, %v288, %v290
        %vm294 = vcmask 1042432
        %v295 = vsel %vm294, %v175, %v191
        %v296 = vsel %vm294, %v179, %v192
        %v297 = vsel %vm294, %v176, %v189
        %vm298 = vcmask 1045504
        %v299 = vsel %vm298, %v295, %v206
        %v300 = vsel %vm298, %v296, %v207
        %v301 = vsel %vm298, %v297, %v204
        %vm302 = vcmask 1040384
        %v303 = vsel %vm302, %v206, %v221
        %v304 = vsel %vm302, %v207, %v222
        %v305 = vsel %vm302, %v204, %v219
        %vm306 = vcmask 1043456
        %v307 = vsel %vm306, %v303, %v235
        %v308 = vsel %vm306, %v304, %v236
        %v309 = vsel %vm306, %v305, %v233
        %vm310 = vcmask 1046528
        %v311 = vsel %vm310, %v307, %v250
        %v312 = vsel %vm310, %v308, %v251
        %v313 = vsel %vm310, %v309, %v248
        %vm314 = vcmask 1041408
        %v315 = vsel %vm314, %v250, %v265
        %v316 = vsel %vm314, %v251, %v266
        %v317 = vsel %vm314, %v248, %v263
        %vm318 = vcmask 1044480
        %v319 = vsel %vm318, %v315, %v280
        %v320 = vsel %vm318, %v316, %v281
        %v321 = vsel %vm318, %v317, %v278
        %323 = vset.pattern.permute.xlu0 0
        %324 = vperm.xlu0 %323, %v172
        %v325 = vpop.permute.xlu0 %324
        %328 = vset.pattern.permute.xlu0 0
        %329 = vperm.xlu0 %328, %v173
        %v330 = vpop.permute.xlu0 %329
        %333 = vset.pattern.permute.xlu0 0
        %334 = vperm.xlu0 %333, %v174
        %v335 = vpop.permute.xlu0 %334
        %vm337 = vcmask 220160
        %v339 = vsel %vm337, %v169, 0
        %v342 = vsel %vm337, %v170, 0
        %v345 = vsel %vm337, %v171, 0
        %v347 = vsel %vm294, %v292, 0
        %v349 = vsel %vm294, %v293, 0
        %v351 = vsel %vm294, %v290, 0
        %353 = vmatprep.subr.mxu0 %v300
        %354 = vmatpush1.msra.mxu0 %v299
        %355 = vmatprep.subr.mxu0 %v312
        %356 = vmatpush1.msra.mxu0 %v311
        %357 = vmatprep.subr.mxu0 %v320
        %358 = vmatpush1.msra.mxu0 %v319
        %359 = vmatprep.subr.mxu0 %v349
        %360 = vmatpush1.msra.mxu0 %v347
        %361 = vmatprep.subr.mxu0 0.0
        %362 = vmatpush1.msra.mxu0 0.0
        %363 = vmatprep.subr.mxu0 0.0
        %364 = vmatpush1.msra.mxu0 0.0
        %365 = vmatprep.subr.mxu0 0.0
        %366 = vmatpush1.msra.mxu0 0.0
        %367 = vmatprep.subr.mxu0 0.0
        %368 = vmatpush1.msra.mxu0 0.0
        %369 = vmatprep.subr.mxu0 0.0
        %370 = vmatpush1.msra.mxu0 0.0
        %371 = vmatprep.subr.mxu0 0.0
        %372 = vmatpush1.msra.mxu0 0.0
        %373 = vmatprep.subr.mxu0 0.0
        %374 = vmatpush1.msra.mxu0 0.0
        %375 = vmatprep.subr.mxu0 0.0
        %376 = vmatpush1.msra.mxu0 0.0
        %377 = vmatprep.subr.mxu0 0.0
        %378 = vmatpush1.msra.mxu0 0.0
        %379 = vmatprep.subr.mxu0 0.0
        %380 = vmatpush1.msra.mxu0 0.0
        %381 = vmatprep.subr.mxu0 0.0
        %382 = vmatpush1.msra.mxu0 0.0
        %383 = vmatprep.subr.mxu0 0.0
        %384 = vmatpush1.msra.mxu0 0.0
        %385 = vmatprep.subr.mxu0 0.0
        %386 = vmatpush1.msra.mxu0 0.0
        %387 = vmatprep.subr.mxu0 0.0
        %388 = vmatpush1.msra.mxu0 0.0
        %389 = vmatprep.subr.mxu0 0.0
        %390 = vmatpush1.msra.mxu0 0.0
        %391 = vmatprep.subr.mxu0 0.0
        %392 = vmatpush1.msra.mxu0 0.0
        %393 = vmatprep.subr.mxu0 0.0
        %394 = vmatpush1.msra.mxu0 0.0
        %395 = vmatprep.subr.mxu0 0.0
        %396 = vmatpush1.msra.mxu0 0.0
        %397 = vmatprep.subr.mxu0 0.0
        %398 = vmatpush1.msra.mxu0 0.0
        %399 = vmatprep.subr.mxu0 0.0
        %400 = vmatpush1.msra.mxu0 0.0
        %401 = vmatprep.subr.mxu0 0.0
        %402 = vmatpush1.msra.mxu0 0.0
        %403 = vmatprep.subr.mxu0 0.0
        %404 = vmatpush1.msra.mxu0 0.0
        %405 = vmatprep.subr.mxu0 0.0
        %406 = vmatpush1.msra.mxu0 0.0
        %407 = vmatprep.subr.mxu0 0.0
        %408 = vmatpush1.msra.mxu0 0.0
        %409 = vmatprep.subr.mxu0 0.0
        %410 = vmatpush1.msra.mxu0 0.0
        %411 = vmatprep.subr.mxu0 0.0
        %412 = vmatpush1.msra.mxu0 0.0
        %413 = vmatprep.subr.mxu0 0.0
        %414 = vmatpush1.msra.mxu0 0.0
        %415 = vmatprep.subr.mxu0 0.0
        %416 = vmatpush1.msra.mxu0 0.0
        %417 = vmatprep.mubr.f32.mxu0 0.0
        %418 = vmatmul.mubr.f32.gmra.mrb[0].mxu0 %v339
        %v419 = vpop.f32.mrb[0].mxu0
        %v420 = vadd.f32 %v325, %v419
        %v421 = vpop.f32.mrb[0].mxu0
        %v422 = vadd.f32 %v325, %v421
        %423 = vmatprep.mubr.f32.mxu0 0.0
        %424 = vmatmul.mubr.f32.gmra.mrb[0].mxu0 %v342
        %v425 = vpop.f32.mrb[0].mxu0
        %v426 = vadd.f32 %v330, %v425
        %v427 = vpop.f32.mrb[0].mxu0
        %v428 = vadd.f32 %v330, %v427
        %429 = vmatprep.mubr.f32.mxu0 0.0
        %430 = vmatmul.mubr.f32.gmra.mrb[0].mxu0 %v345
        %v431 = vpop.f32.mrb[0].mxu0
        %v432 = vadd.f32 %v335, %v431
        %v433 = vpop.f32.mrb[0].mxu0
        %v434 = vadd.f32 %v335, %v433
        %435 = vdwg.mxu0
        %436 = vmatprep.subr.mxu0 0.0
        %437 = vmatpush1.msra.mxu0 %v301
        %438 = vmatprep.subr.mxu0 0.0
        %439 = vmatpush1.msra.mxu0 %v313
        %440 = vmatprep.subr.mxu0 0.0
        %441 = vmatpush1.msra.mxu0 %v321
        %442 = vmatprep.subr.mxu0 0.0
        %443 = vmatpush1.msra.mxu0 %v351
        %444 = vmatprep.subr.mxu0 0.0
        %445 = vmatpush1.msra.mxu0 0.0
        %446 = vmatprep.subr.mxu0 0.0
        %447 = vmatpush1.msra.mxu0 0.0
        %448 = vmatprep.subr.mxu0 0.0
        %449 = vmatpush1.msra.mxu0 0.0
        %450 = vmatprep.subr.mxu0 0.0
        %451 = vmatpush1.msra.mxu0 0.0
        %452 = vmatprep.subr.mxu0 0.0
        %453 = vmatpush1.msra.mxu0 0.0
        %454 = vmatprep.subr.mxu0 0.0
        %455 = vmatpush1.msra.mxu0 0.0
        %456 = vmatprep.subr.mxu0 0.0
        %457 = vmatpush1.msra.mxu0 0.0
        %458 = vmatprep.subr.mxu0 0.0
        %459 = vmatpush1.msra.mxu0 0.0
        %460 = vmatprep.subr.mxu0 0.0
        %461 = vmatpush1.msra.mxu0 0.0
        %462 = vmatprep.subr.mxu0 0.0
        %463 = vmatpush1.msra.mxu0 0.0
        %464 = vmatprep.subr.mxu0 0.0
        %465 = vmatpush1.msra.mxu0 0.0
        %466 = vmatprep.subr.mxu0 0.0
        %467 = vmatpush1.msra.mxu0 0.0
        %468 = vmatprep.subr.mxu0 0.0
        %469 = vmatpush1.msra.mxu0 0.0
        %470 = vmatprep.subr.mxu0 0.0
        %471 = vmatpush1.msra.mxu0 0.0
        %472 = vmatprep.subr.mxu0 0.0
        %473 = vmatpush1.msra.mxu0 0.0
        %474 = vmatprep.subr.mxu0 0.0
        %475 = vmatpush1.msra.mxu0 0.0
        %476 = vmatprep.subr.mxu0 0.0
        %477 = vmatpush1.msra.mxu0 0.0
        %478 = vmatprep.subr.mxu0 0.0
        %479 = vmatpush1.msra.mxu0 0.0
        %480 = vmatprep.subr.mxu0 0.0
        %481 = vmatpush1.msra.mxu0 0.0
        %482 = vmatprep.subr.mxu0 0.0
        %483 = vmatpush1.msra.mxu0 0.0
        %484 = vmatprep.subr.mxu0 0.0
        %485 = vmatpush1.msra.mxu0 0.0
        %486 = vmatprep.subr.mxu0 0.0
        %487 = vmatpush1.msra.mxu0 0.0
        %488 = vmatprep.subr.mxu0 0.0
        %489 = vmatpush1.msra.mxu0 0.0
        %490 = vmatprep.subr.mxu0 0.0
        %491 = vmatpush1.msra.mxu0 0.0
        %492 = vmatprep.subr.mxu0 0.0
        %493 = vmatpush1.msra.mxu0 0.0
        %494 = vmatprep.subr.mxu0 0.0
        %495 = vmatpush1.msra.mxu0 0.0
        %496 = vmatprep.subr.mxu0 0.0
        %497 = vmatpush1.msra.mxu0 0.0
        %498 = vmatprep.subr.mxu0 0.0
        %499 = vmatpush1.msra.mxu0 0.0
        %500 = vmatprep.mubr.f32.mxu0 0.0
        %501 = vmatmul.mubr.f32.gmra.mrb[0].mxu0 %v339
        %v502 = vpop.f32.mrb[0].mxu0
        %v503 = vadd.f32 %v325, %v502
        %v504 = vpop.f32.mrb[0].mxu0
        %505 = vmatprep.mubr.f32.mxu0 0.0
        %506 = vmatmul.mubr.f32.gmra.mrb[0].mxu0 %v342
        %v507 = vpop.f32.mrb[0].mxu0
        %v508 = vadd.f32 %v330, %v507
        %v509 = vpop.f32.mrb[0].mxu0
        %510 = vmatprep.mubr.f32.mxu0 0.0
        %511 = vmatmul.mubr.f32.gmra.mrb[0].mxu0 %v345
        %v512 = vpop.f32.mrb[0].mxu0
        %v513 = vadd.f32 %v335, %v512
        %v514 = vpop.f32.mrb[0].mxu0
        %515 = vdwg.mxu0
        %v516 = vmax.f32 %v420, 0.0
        %v517 = vmax.f32 %v422, 0.0
        %v518 = vmax.f32 %v503, 0.0
        %v519 = vmax.f32 %v426, 0.0
        %v520 = vmax.f32 %v428, 0.0
        %v521 = vmax.f32 %v508, 0.0
        %v522 = vmax.f32 %v432, 0.0
        %v523 = vmax.f32 %v434, 0.0
        %v524 = vmax.f32 %v513, 0.0
        %525 = vst [vmem:[%s163] sm:$0xff] %v516
        %526 = vst [vmem:[%s163 + $0x8] sm:$0xff] %v517
        %vm527 = vcmask 261120
        %528 = vst.msk [vmem:[%s163 + $0x10] sm:$0xff] %vm527, %v518
        %529 = vst [vmem:[%s163 + $0x18] sm:$0xff] %v519
        %530 = vst [vmem:[%s163 + $0x20] sm:$0xff] %v520
        %531 = vst.msk [vmem:[%s163 + $0x28] sm:$0xff] %vm527, %v521
        %532 = vst [vmem:[%s163 + $0x30] sm:$0xff] %v522
        %533 = vst [vmem:[%s163 + $0x38] sm:$0xff] %v523
        %534 = vst.msk [vmem:[%s163 + $0x40] sm:$0xff] %vm527, %v524
        %s535 = sand.u32 %s93, 1
        %s536 = scalar_lea.sflag [#allocation3], %s535
        %s537 = sand.u32 %s93, 1
        %s538 = smul.addr %s537, 72
        %s539 = scalar_lea.vmem [#allocation2], %s538
        // Predicated region
        $region33: #{tpu_custom_call.1} parent=31 // pred_check
          %p540 = pneg %p103
        $region34: #{tpu_custom_call.1} parent=31 // pred_check_branch
          %542 = sbr.rel (%p540) target = $region36
        $region35: #{tpu_custom_call.1} parent=31 // pred_region
          %s544 = ssub.s32 1152, 1152
          %545 = vsyncadd %s536, %s544
          %s546 = smul.addr %s17, 9
          %s547 = smul.addr %s546, 128
          %s548 = scalar_lea.hbm %s3, %s547
          %s549 = sshll.u32 %s539, 4
          %s550 = int_to_ptr.vmem [resolvable:$true] %s549
          %555 = dma.vmem_to_hbm [thread:$0]  %s550, 1152, %s548, %s536, 384, 384, 24
        $region36: #{tpu_custom_call.1} parent=31 // pred_fallthru
          _
      $region32: #{tpu_custom_call.1} parent=5 // pred_fallthru
        _
      %p556 = scmp.le.s32.totalorder 2, %s12
      // Predicated region
      $region37: #{tpu_custom_call.1} parent=5 // pred_check
        %p557 = pneg %p556
      $region38: #{tpu_custom_call.1} parent=5 // pred_check_branch
        %559 = sbr.rel (%p557) target = $region40
      $region39: #{tpu_custom_call.1} parent=5 // pred_region
        %s560 = ssub.s32 %s12, 2
        // Predicated region
        $region41: #{tpu_custom_call.1} parent=39 // pred_check
          %p561 = pneg %p109
        $region42: #{tpu_custom_call.1} parent=39 // pred_check_branch
          %563 = sbr.rel (%p561) target = $region44
        $region43: #{tpu_custom_call.1} parent=39 // pred_region
          %s564 = sand.u32 %s94, 1
          %s565 = scalar_lea.sflag [#allocation3], %s564
          %s566 = sand.u32 %s94, 1
          %s567 = smul.addr %s566, 72
          %s568 = scalar_lea.vmem [#allocation2], %s567
          %569 = dma.done %s565, 1152
        $region44: #{tpu_custom_call.1} parent=39 // pred_fallthru
          _
      $region40: #{tpu_custom_call.1} parent=5 // pred_fallthru
        _
    $region6: #{tpu_custom_call.1} parent=1 // loop_footer
      %s16 = sadd.s32 1, %s12
    $region7: #{tpu_custom_call.1} parent=1 // loop_footer_branch
      %11 = sbr.rel target = $region3
    $region8: #{tpu_custom_call.1} parent=1 // loop_exit
      _
    %570 = vsyncpa [#allocation3], 1
    %s571 = scalar_lea.sflag [#allocation3], 1
    %572 = vsyncpa %s571, 1

</llo_original>
